<compile_context>
chip_gen: v5e
topology: v5e:2x2
jax: 0.10.0
libtpu: 0.0.40
codegen_flags: <defaults>
</compile_context>

<pallas_src>
import functools

import jax
import jax.numpy as jnp
from jax.experimental import pallas as pl
from jax.experimental.pallas import tpu as pltpu


# ----------------------- hyper-params (self.p of the module) -----------------
class P:
    num_ent = 100
    num_rel = 5             # relation table has num_rel * 2 rows
    embed_dim = 32
    gcn_dim = 32            # must equal k_w * k_h
    num_heads = 2
    num_filt = 8
    k_w = 4
    k_h = 8
    k_z = 3
    bias = True
    gcn_drop = embed_drop = feat_drop = hid_drop = 0.0   # eval mode -> identity


EPS = 1e-5
LANE = 128                                          # TPU lane width
SUB = 8                                             # f32 sublane height


def _round_up(x, m):
    return ((x + m - 1) // m) * m


KZ = P.k_z
KK = KZ * KZ                                        # 9 conv taps
F = P.num_filt                                      # 8 filters
G = P.gcn_dim                                       # 32 hidden
HO = 2 * P.k_w - KZ + 1                             # 6
WO = P.k_h - KZ + 1                                 # 6
PN = HO * WO                                        # 36 conv output positions
FLAT_SZ = F * PN                                    # 288 (PyTorch flat_sz)

# Dense-packed conv-activation layout: 3 filters (3*36=108 lanes) per 128-lane
# block; filter f lives at lane offset OFFS[f].  No store crosses a 128-lane
# tile boundary, and the fc matmul K is only 384 (vs 1024 before).
FILT_PER_BLK = 3
OFFS = [(f // FILT_PER_BLK) * LANE + (f % FILT_PER_BLK) * PN for f in range(F)]
FLAT_PAD = _round_up(F, FILT_PER_BLK) // FILT_PER_BLK * LANE      # 384

# Entity-axis tiling: >=256-wide tiles fill the 256-wide v6e/v7x MXU and
# amortize the ~0.35us per-grid-step overhead; 512 is comfortably inside v7x's
# 64 MiB VMEM even double-buffered.  Collapses to one 128-wide tile at toy
# num_ent.
TILE_N = min(512, _round_up(P.num_ent, LANE))
NE_PAD = _round_up(P.num_ent, TILE_N)               # lane-dense score width


# ----------------------------- fused Pallas kernel ---------------------------
def conve_fused_kernel(patches_ref, cw_ref, cb_ref, fcwt_ref, fcb_ref, entt_ref,
                       out_ref, flat_ref):
    """bn0+conv+bn1 (folded, VPU, f32) -> relu -> fc+bn2 (folded, bf16 MXU)
       -> relu -> scores vs one entity tile (bf16 MXU) -> sigmoid (f32).

    Per grid step n (entity tile):
      patches: (KK, B, PN)     VMEM  im2col taps (fetched once, const index map)
      cw:      (F*KK,)         SMEM  conv weight, bn0 & bn1 folded in
      cb:      (F,)            SMEM  conv bias,   bn0 & bn1 folded in
      fcwt:    (FLAT_PAD, G)   VMEM  bf16 fc weight^T, bn2-folded, packed layout
      fcb:     (1, G)          VMEM  fc bias, bn2-folded (f32)
      entt:    (G, TILE_N)     VMEM  bf16 entity-table^T tile (auto-pipelined)
      out:     (B, TILE_N)     VMEM  sigmoid scores, lane-dense
      flat_ref (scratch): (B, FLAT_PAD) VMEM  packed conv activations (f32)
    """
    # Zero the packed activation scratch: the gap/pad lanes are never written
    # by the conv stores and must be 0 (uninitialized VMEM could hold NaN and
    # NaN * 0 = NaN would leak through the zero rows of fcwt).
    flat_ref[...] = jnp.zeros_like(flat_ref)

    # 3x3 VALID conv as KK VPU multiply-accumulates per filter.  Weights are
    # SMEM scalars (free on the scalar path); taps are loaded once and reused.
    taps = [patches_ref[k] for k in range(KK)]                  # (B, PN) each
    for f in range(F):
        row = cb_ref[f] + cw_ref[f * KK] * taps[0]
        for k in range(1, KK):
            row = row + cw_ref[f * KK + k] * taps[k]
        # relu; filter f's 36 lanes stay inside one 128-lane tile.
        flat_ref[:, OFFS[f]:OFFS[f] + PN] = jnp.maximum(row, 0.0)

    # fc (+bn2 folded) -> relu.   (B, 384) @ (384, G); bf16 operands, f32 acc.
    h = jnp.dot(flat_ref[...].astype(jnp.bfloat16), fcwt_ref[...],
                preferred_element_type=jnp.float32)
    h = jnp.maximum(h + fcb_ref[...], 0.0)

    # scores against this entity tile.  (B, G) @ (G, TILE_N); bf16 operands.
    logits = jnp.dot(h.astype(jnp.bfloat16), entt_ref[...],
                     preferred_element_type=jnp.float32)
    out_ref[...] = jax.nn.sigmoid(logits)


_SMEM = pl.BlockSpec(memory_space=pltpu.MemorySpace.SMEM)


def _conve_score(patches, cw, cb, fcwt, fcb, entt):
    b_pad = patches.shape[1]
    return pl.pallas_call(
        conve_fused_kernel,
        out_shape=jax.ShapeDtypeStruct((b_pad, NE_PAD), jnp.float32),
        grid=(NE_PAD // TILE_N,),
        in_specs=[
            # constant index maps -> fetched once, resident across the grid
            pl.BlockSpec((KK, b_pad, PN), lambda n: (0, 0, 0)),
            _SMEM,
            _SMEM,
            pl.BlockSpec((FLAT_PAD, G), lambda n: (0, 0)),
            pl.BlockSpec((1, G), lambda n: (0, 0)),
            # entity tile stream: auto double-buffered by Pallas
            pl.BlockSpec((G, TILE_N), lambda n: (0, n)),
        ],
        out_specs=pl.BlockSpec((b_pad, TILE_N), lambda n: (0, n)),
        scratch_shapes=[pltpu.VMEM((b_pad, FLAT_PAD), jnp.float32)],
        compiler_params=pltpu.CompilerParams(
            dimension_semantics=("parallel",)),    # shards across v7x's 2 TCs
    )(patches, cw, cb, fcwt, fcb, entt)


# ----------------------------- parameters ------------------------------------
def init_params(key):
    ks = jax.random.split(key, 18)

    def n(i, shape, s=0.1):
        return s * jax.random.normal(ks[i], shape, jnp.float32)

    return {
        "ent_embed": n(0, (P.num_ent, P.embed_dim)),
        "rel_embed": n(1, (P.num_rel * 2, P.embed_dim)),
        "conv_w": n(2, (F, 1, KZ, KZ)),
        "conv_b": n(3, (F,)),
        "fc_w": n(4, (G, FLAT_SZ), 0.05),
        "fc_b": n(5, (G,)),
        # BatchNorm affine params + running statistics (eval mode).
        "bn0_gamma": 1.0 + n(6, (1,)), "bn0_beta": n(7, (1,)),
        "bn0_mean": n(8, (1,)),        "bn0_var": 1.0 + jnp.abs(n(9, (1,))),
        "bn1_gamma": 1.0 + n(10, (F,)), "bn1_beta": n(11, (F,)),
        "bn1_mean": n(12, (F,)),        "bn1_var": 1.0 + jnp.abs(n(13, (F,))),
        "bn2_gamma": 1.0 + n(14, (G,)), "bn2_beta": n(15, (G,)),
        "bn2_mean": n(16, (G,)),        "bn2_var": 1.0 + jnp.abs(n(17, (G,))),
    }


def prepare_params(prm):
    """One-time weight plumbing: fold all eval-mode BatchNorm affines into the
    conv / fc weights, re-lay + zero-pad the fc weight to the kernel's packed
    activation layout, pre-transpose / pad the entity table, and cast the two
    MXU weight operands (fcwt, entt) to bf16.  Runs once per checkpoint."""
    s0 = prm["bn0_gamma"] / jnp.sqrt(prm["bn0_var"] + EPS)            # (1,)
    b0 = prm["bn0_beta"] - prm["bn0_mean"] * s0
    s1 = prm["bn1_gamma"] / jnp.sqrt(prm["bn1_var"] + EPS)            # (F,)
    b1 = prm["bn1_beta"] - prm["bn1_mean"] * s1
    s2 = prm["bn2_gamma"] / jnp.sqrt(prm["bn2_var"] + EPS)            # (G,)
    b2 = prm["bn2_beta"] - prm["bn2_mean"] * s2

    # conv: conv(bn0(x)) + b, then bn1  ==  (s0*s1)*w  (*)  x  +  folded bias.
    w2 = prm["conv_w"].reshape(F, KK)
    cw = ((s0[0] * w2) * s1[:, None]).reshape(-1)                     # (F*KK,)
    cb = (prm["conv_b"] + b0[0] * w2.sum(axis=1)) * s1 + b1           # (F,)

    # fc: bn2(fc(flat))  ==  flat @ (fcW*s2).T + folded bias.
    # PyTorch flattens NCHW => columns ordered (f, ho*WO+wo); scatter each
    # filter's 36 columns to the kernel's packed lane offset OFFS[f].
    fc3 = (prm["fc_w"] * s2[:, None]).reshape(G, F, PN)
    fcwt_full = jnp.zeros((G, FLAT_PAD), jnp.float32)
    for f in range(F):
        fcwt_full = fcwt_full.at[:, OFFS[f]:OFFS[f] + PN].set(fc3[:, f, :])
    fcwt = fcwt_full.T.astype(jnp.bfloat16)                           # (384, G)
    fcb = (prm["fc_b"] * s2 + b2).reshape(1, G)

    entt = jnp.pad(prm["ent_embed"].T,
                   ((0, 0), (0, NE_PAD - P.num_ent))).astype(jnp.bfloat16)

    return {
        "ent_embed": prm["ent_embed"],      # f32 table for the gather path
        "rel_embed": prm["rel_embed"],
        "cw": cw, "cb": cb, "fcwt": fcwt, "fcb": fcb, "entt": entt,
    }


# ----------------------------- forward (glue + kernel) ------------------------
@functools.partial(jax.jit, static_argnames=("run_mode",))
def bagcn_conve_forward(prep, sub, rel, neg_tail, run_mode):
    b = sub.shape[0]
    # Pad the batch to a multiple of the 8-row f32 sublane height so every
    # (B, ...) tile and both matmul M dims use full sublanes; padded rows are
    # garbage and sliced off below.
    b_pad = max(SUB, _round_up(b, SUB))
    sub_p = jnp.pad(sub, (0, b_pad - b))
    rel_p = jnp.pad(rel, (0, b_pad - b))

    # ---- forward_base (GCN layers skipped, see TODO at top of file) ----
    sub_emb = jnp.take(prep["ent_embed"], sub_p, axis=0)              # (Bp, G)
    rel_emb = jnp.take(prep["rel_embed"], rel_p, axis=0)              # (Bp, G)

    # ---- concat(): (B,2,G) -> transpose(2,1) -> (B, 2*k_w, k_h) ----
    stacked = jnp.stack([sub_emb, rel_emb], axis=2).reshape(
        b_pad, 2 * P.k_w, P.k_h).astype(jnp.float32)

    # ---- im2col taps (fuses into one XLA copy under jit) ----
    patches = jnp.stack(
        [stacked[:, di:di + HO, dj:dj + WO].reshape(b_pad, PN)
         for di in range(KZ) for dj in range(KZ)], axis=0)            # (KK,Bp,PN)

    # ---- single fused Pallas kernel, gridded over entity tiles ----
    scores = _conve_score(patches, prep["cw"], prep["cb"],
                          prep["fcwt"], prep["fcb"], prep["entt"])[:b]

    if run_mode == "train":
        # neg_tail < num_ent, so the padded entity columns (sigmoid(0)=0.5)
        # are never gathered.  Keep this slice/gather mandatory.
        return jnp.take_along_axis(scores, neg_tail, axis=1)
    return scores[:, :P.num_ent]


# ----------------------------- pure-JAX reference ------------------------------
def reference_forward(prm, sub, rel, neg_tail, run_mode):
    b = sub.shape[0]
    ent = prm["ent_embed"]
    sub_emb = jnp.take(ent, sub, axis=0)
    rel_emb = jnp.take(prm["rel_embed"], rel, axis=0)
    x = jnp.stack([sub_emb, rel_emb], axis=2).reshape(b, 1, 2 * P.k_w, P.k_h)

    def bn4(v, pfx):
        m = prm[pfx + "_mean"][None, :, None, None]
        s = jnp.sqrt(prm[pfx + "_var"] + EPS)[None, :, None, None]
        g = prm[pfx + "_gamma"][None, :, None, None]
        be = prm[pfx + "_beta"][None, :, None, None]
        return (v - m) / s * g + be

    x = bn4(x, "bn0")
    y = jax.lax.conv_general_dilated(x, prm["conv_w"], (1, 1), "VALID",
                                     dimension_numbers=("NCHW", "OIHW", "NCHW"))
    y = y + prm["conv_b"][None, :, None, None]
    y = bn4(y, "bn1")
    y = jnp.maximum(y, 0.0).reshape(b, -1)
    h = y @ prm["fc_w"].T + prm["fc_b"]
    h = (h - prm["bn2_mean"]) / jnp.sqrt(prm["bn2_var"] + EPS) \
        * prm["bn2_gamma"] + prm["bn2_beta"]
    h = jnp.maximum(h, 0.0)
    out = jax.nn.sigmoid(h @ ent.T)
    if run_mode == "train":
        out = jnp.take_along_axis(out, neg_tail, axis=1)
    return out


# ----------------------------------- main --------------------------------------
if __name__ == "__main__":
    root = jax.random.PRNGKey(0)
    k_prm, k_sub, k_rel, k_neg = jax.random.split(root, 4)

    prm = init_params(k_prm)
    prep = prepare_params(prm)       # one-time weight plumbing (not per step)

    B, n_neg = 2, 10
    sub = jax.random.randint(k_sub, (B,), 0, P.num_ent, dtype=jnp.int32)
    rel = jax.random.randint(k_rel, (B,), 0, P.num_rel * 2, dtype=jnp.int32)
    neg_tail = jax.random.randint(k_neg, (B, n_neg), 0, P.num_ent, dtype=jnp.int32)

    # bf16 MXU operands (fcwt, entt) vs f32 reference -> loosened tolerance.
    ATOL = RTOL = 1e-2

    # train mode: scores gathered at the sampled negatives
    out_tr = jax.block_until_ready(bagcn_conve_forward(prep, sub, rel, neg_tail, "train"))
    ref_tr = jax.block_until_ready(reference_forward(prm, sub, rel, neg_tail, "train"))
    assert out_tr.shape == (B, n_neg), out_tr.shape
    assert jnp.allclose(out_tr, ref_tr, atol=ATOL, rtol=RTOL), (out_tr, ref_tr)

    # eval mode: full score matrix against all entities
    out_te = jax.block_until_ready(bagcn_conve_forward(prep, sub, rel, neg_tail, "test"))
    ref_te = jax.block_until_ready(reference_forward(prm, sub, rel, neg_tail, "test"))
    assert out_te.shape == (B, P.num_ent), out_te.shape
    assert jnp.allclose(out_te, ref_te, atol=ATOL, rtol=RTOL), (out_te, ref_te)

    print("KERNEL_OK")
</pallas_src>

<mosaic_0001>
module attributes {stable_mosaic.version = 11 : i64} {
  func.func @conve_fused_kernel(%arg0: i32, %arg1: memref<9x8x36xf32, #tpu.memory_space<vmem>>, %arg2: memref<72xf32, #tpu.memory_space<smem>>, %arg3: memref<8xf32, #tpu.memory_space<smem>>, %arg4: memref<384x32xbf16, #tpu.memory_space<vmem>>, %arg5: memref<1x32xf32, #tpu.memory_space<vmem>>, %arg6: memref<32x128xbf16, #tpu.memory_space<vmem>>, %arg7: memref<8x128xf32, #tpu.memory_space<vmem>>, %arg8: memref<8x384xf32, #tpu.memory_space<vmem>>) attributes {dimension_semantics = [#tpu.dimension_semantics<parallel>], iteration_bounds = array<i64: 1>, scalar_prefetch = 0 : i64, scratch_operands = 1 : i64, tpu.core_type = #tpu.core_type<tc>, window_params = [{pipeline_mode = #tpu.pipeline_mode<synchronous>, transform_indices = @transform_0, window_bounds = array<i64: 9, 8, 36>}, {transform_indices = @transform_1, window_bounds = array<i64: 72>}, {transform_indices = @transform_2, window_bounds = array<i64: 8>}, {pipeline_mode = #tpu.pipeline_mode<synchronous>, transform_indices = @transform_3, window_bounds = array<i64: 384, 32>}, {pipeline_mode = #tpu.pipeline_mode<synchronous>, transform_indices = @transform_4, window_bounds = array<i64: 1, 32>}, {transform_indices = @transform_5, window_bounds = array<i64: 32, 128>}, {transform_indices = @transform_6, window_bounds = array<i64: 8, 128>}]} {
    %cst = arith.constant 0.000000e+00 : f32
    %0 = vector.broadcast %cst : f32 to vector<8x384xf32>
    %c0 = arith.constant 0 : index
    %c0_0 = arith.constant 0 : index
    %1 = vector.load %arg8[%c0, %c0_0] : memref<8x384xf32, #tpu.memory_space<vmem>>, vector<8x384xf32>
    tpu.vector_store %arg8[%c0, %c0_0], %0 {strides = array<i32>} : memref<8x384xf32, #tpu.memory_space<vmem>>, vector<8x384xf32>,
    %c0_1 = arith.constant 0 : index
    %c0_2 = arith.constant 0 : index
    %c0_3 = arith.constant 0 : index
    %2 = vector.load %arg1[%c0_1, %c0_2, %c0_3] : memref<9x8x36xf32, #tpu.memory_space<vmem>>, vector<1x8x36xf32>
    %3 = vector.shape_cast %2 : vector<1x8x36xf32> to vector<8x36xf32>
    %c1 = arith.constant 1 : index
    %c0_4 = arith.constant 0 : index
    %c0_5 = arith.constant 0 : index
    %4 = vector.load %arg1[%c1, %c0_4, %c0_5] : memref<9x8x36xf32, #tpu.memory_space<vmem>>, vector<1x8x36xf32>
    %5 = vector.shape_cast %4 : vector<1x8x36xf32> to vector<8x36xf32>
    %c2 = arith.constant 2 : index
    %c0_6 = arith.constant 0 : index
    %c0_7 = arith.constant 0 : index
    %6 = vector.load %arg1[%c2, %c0_6, %c0_7] : memref<9x8x36xf32, #tpu.memory_space<vmem>>, vector<1x8x36xf32>
    %7 = vector.shape_cast %6 : vector<1x8x36xf32> to vector<8x36xf32>
    %c3 = arith.constant 3 : index
    %c0_8 = arith.constant 0 : index
    %c0_9 = arith.constant 0 : index
    %8 = vector.load %arg1[%c3, %c0_8, %c0_9] : memref<9x8x36xf32, #tpu.memory_space<vmem>>, vector<1x8x36xf32>
    %9 = vector.shape_cast %8 : vector<1x8x36xf32> to vector<8x36xf32>
    %c4 = arith.constant 4 : index
    %c0_10 = arith.constant 0 : index
    %c0_11 = arith.constant 0 : index
    %10 = vector.load %arg1[%c4, %c0_10, %c0_11] : memref<9x8x36xf32, #tpu.memory_space<vmem>>, vector<1x8x36xf32>
    %11 = vector.shape_cast %10 : vector<1x8x36xf32> to vector<8x36xf32>
    %c5 = arith.constant 5 : index
    %c0_12 = arith.constant 0 : index
    %c0_13 = arith.constant 0 : index
    %12 = vector.load %arg1[%c5, %c0_12, %c0_13] : memref<9x8x36xf32, #tpu.memory_space<vmem>>, vector<1x8x36xf32>
    %13 = vector.shape_cast %12 : vector<1x8x36xf32> to vector<8x36xf32>
    %c6 = arith.constant 6 : index
    %c0_14 = arith.constant 0 : index
    %c0_15 = arith.constant 0 : index
    %14 = vector.load %arg1[%c6, %c0_14, %c0_15] : memref<9x8x36xf32, #tpu.memory_space<vmem>>, vector<1x8x36xf32>
    %15 = vector.shape_cast %14 : vector<1x8x36xf32> to vector<8x36xf32>
    %c7 = arith.constant 7 : index
    %c0_16 = arith.constant 0 : index
    %c0_17 = arith.constant 0 : index
    %16 = vector.load %arg1[%c7, %c0_16, %c0_17] : memref<9x8x36xf32, #tpu.memory_space<vmem>>, vector<1x8x36xf32>
    %17 = vector.shape_cast %16 : vector<1x8x36xf32> to vector<8x36xf32>
    %c8 = arith.constant 8 : index
    %c0_18 = arith.constant 0 : index
    %c0_19 = arith.constant 0 : index
    %18 = vector.load %arg1[%c8, %c0_18, %c0_19] : memref<9x8x36xf32, #tpu.memory_space<vmem>>, vector<1x8x36xf32>
    %19 = vector.shape_cast %18 : vector<1x8x36xf32> to vector<8x36xf32>
    %c0_20 = arith.constant 0 : index
    %20 = memref.load %arg3[%c0_20] : memref<8xf32, #tpu.memory_space<smem>>
    %c0_21 = arith.constant 0 : index
    %21 = memref.load %arg2[%c0_21] : memref<72xf32, #tpu.memory_space<smem>>
    %22 = vector.broadcast %21 : f32 to vector<8x36xf32>
    %23 = arith.mulf %22, %3 : vector<8x36xf32>
    %24 = vector.broadcast %20 : f32 to vector<8x36xf32>
    %25 = arith.addf %24, %23 : vector<8x36xf32>
    %c1_22 = arith.constant 1 : index
    %26 = memref.load %arg2[%c1_22] : memref<72xf32, #tpu.memory_space<smem>>
    %27 = vector.broadcast %26 : f32 to vector<8x36xf32>
    %28 = arith.mulf %27, %5 : vector<8x36xf32>
    %29 = arith.addf %25, %28 : vector<8x36xf32>
    %c2_23 = arith.constant 2 : index
    %30 = memref.load %arg2[%c2_23] : memref<72xf32, #tpu.memory_space<smem>>
    %31 = vector.broadcast %30 : f32 to vector<8x36xf32>
    %32 = arith.mulf %31, %7 : vector<8x36xf32>
    %33 = arith.addf %29, %32 : vector<8x36xf32>
    %c3_24 = arith.constant 3 : index
    %34 = memref.load %arg2[%c3_24] : memref<72xf32, #tpu.memory_space<smem>>
    %35 = vector.broadcast %34 : f32 to vector<8x36xf32>
    %36 = arith.mulf %35, %9 : vector<8x36xf32>
    %37 = arith.addf %33, %36 : vector<8x36xf32>
    %c4_25 = arith.constant 4 : index
    %38 = memref.load %arg2[%c4_25] : memref<72xf32, #tpu.memory_space<smem>>
    %39 = vector.broadcast %38 : f32 to vector<8x36xf32>
    %40 = arith.mulf %39, %11 : vector<8x36xf32>
    %41 = arith.addf %37, %40 : vector<8x36xf32>
    %c5_26 = arith.constant 5 : index
    %42 = memref.load %arg2[%c5_26] : memref<72xf32, #tpu.memory_space<smem>>
    %43 = vector.broadcast %42 : f32 to vector<8x36xf32>
    %44 = arith.mulf %43, %13 : vector<8x36xf32>
    %45 = arith.addf %41, %44 : vector<8x36xf32>
    %c6_27 = arith.constant 6 : index
    %46 = memref.load %arg2[%c6_27] : memref<72xf32, #tpu.memory_space<smem>>
    %47 = vector.broadcast %46 : f32 to vector<8x36xf32>
    %48 = arith.mulf %47, %15 : vector<8x36xf32>
    %49 = arith.addf %45, %48 : vector<8x36xf32>
    %c7_28 = arith.constant 7 : index
    %50 = memref.load %arg2[%c7_28] : memref<72xf32, #tpu.memory_space<smem>>
    %51 = vector.broadcast %50 : f32 to vector<8x36xf32>
    %52 = arith.mulf %51, %17 : vector<8x36xf32>
    %53 = arith.addf %49, %52 : vector<8x36xf32>
    %c8_29 = arith.constant 8 : index
    %54 = memref.load %arg2[%c8_29] : memref<72xf32, #tpu.memory_space<smem>>
    %55 = vector.broadcast %54 : f32 to vector<8x36xf32>
    %56 = arith.mulf %55, %19 : vector<8x36xf32>
    %57 = arith.addf %53, %56 : vector<8x36xf32>
    %cst_30 = arith.constant 0.000000e+00 : f32
    %58 = vector.broadcast %cst_30 : f32 to vector<8x36xf32>
    %59 = arith.maximumf %57, %58 : vector<8x36xf32>
    %c0_31 = arith.constant 0 : index
    %c0_32 = arith.constant 0 : index
    %60 = vector.load %arg8[%c0_31, %c0_32] : memref<8x384xf32, #tpu.memory_space<vmem>>, vector<8x36xf32>
    tpu.vector_store %arg8[%c0_31, %c0_32], %59 {strides = array<i32>} : memref<8x384xf32, #tpu.memory_space<vmem>>, vector<8x36xf32>,
    %c1_33 = arith.constant 1 : index
    %61 = memref.load %arg3[%c1_33] : memref<8xf32, #tpu.memory_space<smem>>
    %c9 = arith.constant 9 : index
    %62 = memref.load %arg2[%c9] : memref<72xf32, #tpu.memory_space<smem>>
    %63 = vector.broadcast %62 : f32 to vector<8x36xf32>
    %64 = arith.mulf %63, %3 : vector<8x36xf32>
    %65 = vector.broadcast %61 : f32 to vector<8x36xf32>
    %66 = arith.addf %65, %64 : vector<8x36xf32>
    %c10 = arith.constant 10 : index
    %67 = memref.load %arg2[%c10] : memref<72xf32, #tpu.memory_space<smem>>
    %68 = vector.broadcast %67 : f32 to vector<8x36xf32>
    %69 = arith.mulf %68, %5 : vector<8x36xf32>
    %70 = arith.addf %66, %69 : vector<8x36xf32>
    %c11 = arith.constant 11 : index
    %71 = memref.load %arg2[%c11] : memref<72xf32, #tpu.memory_space<smem>>
    %72 = vector.broadcast %71 : f32 to vector<8x36xf32>
    %73 = arith.mulf %72, %7 : vector<8x36xf32>
    %74 = arith.addf %70, %73 : vector<8x36xf32>
    %c12 = arith.constant 12 : index
    %75 = memref.load %arg2[%c12] : memref<72xf32, #tpu.memory_space<smem>>
    %76 = vector.broadcast %75 : f32 to vector<8x36xf32>
    %77 = arith.mulf %76, %9 : vector<8x36xf32>
    %78 = arith.addf %74, %77 : vector<8x36xf32>
    %c13 = arith.constant 13 : index
    %79 = memref.load %arg2[%c13] : memref<72xf32, #tpu.memory_space<smem>>
    %80 = vector.broadcast %79 : f32 to vector<8x36xf32>
    %81 = arith.mulf %80, %11 : vector<8x36xf32>
    %82 = arith.addf %78, %81 : vector<8x36xf32>
    %c14 = arith.constant 14 : index
    %83 = memref.load %arg2[%c14] : memref<72xf32, #tpu.memory_space<smem>>
    %84 = vector.broadcast %83 : f32 to vector<8x36xf32>
    %85 = arith.mulf %84, %13 : vector<8x36xf32>
    %86 = arith.addf %82, %85 : vector<8x36xf32>
    %c15 = arith.constant 15 : index
    %87 = memref.load %arg2[%c15] : memref<72xf32, #tpu.memory_space<smem>>
    %88 = vector.broadcast %87 : f32 to vector<8x36xf32>
    %89 = arith.mulf %88, %15 : vector<8x36xf32>
    %90 = arith.addf %86, %89 : vector<8x36xf32>
    %c16 = arith.constant 16 : index
    %91 = memref.load %arg2[%c16] : memref<72xf32, #tpu.memory_space<smem>>
    %92 = vector.broadcast %91 : f32 to vector<8x36xf32>
    %93 = arith.mulf %92, %17 : vector<8x36xf32>
    %94 = arith.addf %90, %93 : vector<8x36xf32>
    %c17 = arith.constant 17 : index
    %95 = memref.load %arg2[%c17] : memref<72xf32, #tpu.memory_space<smem>>
    %96 = vector.broadcast %95 : f32 to vector<8x36xf32>
    %97 = arith.mulf %96, %19 : vector<8x36xf32>
    %98 = arith.addf %94, %97 : vector<8x36xf32>
    %cst_34 = arith.constant 0.000000e+00 : f32
    %99 = vector.broadcast %cst_34 : f32 to vector<8x36xf32>
    %100 = arith.maximumf %98, %99 : vector<8x36xf32>
    %c0_35 = arith.constant 0 : index
    %c36 = arith.constant 36 : index
    %101 = vector.load %arg8[%c0_35, %c36] : memref<8x384xf32, #tpu.memory_space<vmem>>, vector<8x36xf32>
    tpu.vector_store %arg8[%c0_35, %c36], %100 {strides = array<i32>} : memref<8x384xf32, #tpu.memory_space<vmem>>, vector<8x36xf32>,
    %c2_36 = arith.constant 2 : index
    %102 = memref.load %arg3[%c2_36] : memref<8xf32, #tpu.memory_space<smem>>
    %c18 = arith.constant 18 : index
    %103 = memref.load %arg2[%c18] : memref<72xf32, #tpu.memory_space<smem>>
    %104 = vector.broadcast %103 : f32 to vector<8x36xf32>
    %105 = arith.mulf %104, %3 : vector<8x36xf32>
    %106 = vector.broadcast %102 : f32 to vector<8x36xf32>
    %107 = arith.addf %106, %105 : vector<8x36xf32>
    %c19 = arith.constant 19 : index
    %108 = memref.load %arg2[%c19] : memref<72xf32, #tpu.memory_space<smem>>
    %109 = vector.broadcast %108 : f32 to vector<8x36xf32>
    %110 = arith.mulf %109, %5 : vector<8x36xf32>
    %111 = arith.addf %107, %110 : vector<8x36xf32>
    %c20 = arith.constant 20 : index
    %112 = memref.load %arg2[%c20] : memref<72xf32, #tpu.memory_space<smem>>
    %113 = vector.broadcast %112 : f32 to vector<8x36xf32>
    %114 = arith.mulf %113, %7 : vector<8x36xf32>
    %115 = arith.addf %111, %114 : vector<8x36xf32>
    %c21 = arith.constant 21 : index
    %116 = memref.load %arg2[%c21] : memref<72xf32, #tpu.memory_space<smem>>
    %117 = vector.broadcast %116 : f32 to vector<8x36xf32>
    %118 = arith.mulf %117, %9 : vector<8x36xf32>
    %119 = arith.addf %115, %118 : vector<8x36xf32>
    %c22 = arith.constant 22 : index
    %120 = memref.load %arg2[%c22] : memref<72xf32, #tpu.memory_space<smem>>
    %121 = vector.broadcast %120 : f32 to vector<8x36xf32>
    %122 = arith.mulf %121, %11 : vector<8x36xf32>
    %123 = arith.addf %119, %122 : vector<8x36xf32>
    %c23 = arith.constant 23 : index
    %124 = memref.load %arg2[%c23] : memref<72xf32, #tpu.memory_space<smem>>
    %125 = vector.broadcast %124 : f32 to vector<8x36xf32>
    %126 = arith.mulf %125, %13 : vector<8x36xf32>
    %127 = arith.addf %123, %126 : vector<8x36xf32>
    %c24 = arith.constant 24 : index
    %128 = memref.load %arg2[%c24] : memref<72xf32, #tpu.memory_space<smem>>
    %129 = vector.broadcast %128 : f32 to vector<8x36xf32>
    %130 = arith.mulf %129, %15 : vector<8x36xf32>
    %131 = arith.addf %127, %130 : vector<8x36xf32>
    %c25 = arith.constant 25 : index
    %132 = memref.load %arg2[%c25] : memref<72xf32, #tpu.memory_space<smem>>
    %133 = vector.broadcast %132 : f32 to vector<8x36xf32>
    %134 = arith.mulf %133, %17 : vector<8x36xf32>
    %135 = arith.addf %131, %134 : vector<8x36xf32>
    %c26 = arith.constant 26 : index
    %136 = memref.load %arg2[%c26] : memref<72xf32, #tpu.memory_space<smem>>
    %137 = vector.broadcast %136 : f32 to vector<8x36xf32>
    %138 = arith.mulf %137, %19 : vector<8x36xf32>
    %139 = arith.addf %135, %138 : vector<8x36xf32>
    %cst_37 = arith.constant 0.000000e+00 : f32
    %140 = vector.broadcast %cst_37 : f32 to vector<8x36xf32>
    %141 = arith.maximumf %139, %140 : vector<8x36xf32>
    %c0_38 = arith.constant 0 : index
    %c72 = arith.constant 72 : index
    %142 = vector.load %arg8[%c0_38, %c72] : memref<8x384xf32, #tpu.memory_space<vmem>>, vector<8x36xf32>
    tpu.vector_store %arg8[%c0_38, %c72], %141 {strides = array<i32>} : memref<8x384xf32, #tpu.memory_space<vmem>>, vector<8x36xf32>,
    %c3_39 = arith.constant 3 : index
    %143 = memref.load %arg3[%c3_39] : memref<8xf32, #tpu.memory_space<smem>>
    %c27 = arith.constant 27 : index
    %144 = memref.load %arg2[%c27] : memref<72xf32, #tpu.memory_space<smem>>
    %145 = vector.broadcast %144 : f32 to vector<8x36xf32>
    %146 = arith.mulf %145, %3 : vector<8x36xf32>
    %147 = vector.broadcast %143 : f32 to vector<8x36xf32>
    %148 = arith.addf %147, %146 : vector<8x36xf32>
    %c28 = arith.constant 28 : index
    %149 = memref.load %arg2[%c28] : memref<72xf32, #tpu.memory_space<smem>>
    %150 = vector.broadcast %149 : f32 to vector<8x36xf32>
    %151 = arith.mulf %150, %5 : vector<8x36xf32>
    %152 = arith.addf %148, %151 : vector<8x36xf32>
    %c29 = arith.constant 29 : index
    %153 = memref.load %arg2[%c29] : memref<72xf32, #tpu.memory_space<smem>>
    %154 = vector.broadcast %153 : f32 to vector<8x36xf32>
    %155 = arith.mulf %154, %7 : vector<8x36xf32>
    %156 = arith.addf %152, %155 : vector<8x36xf32>
    %c30 = arith.constant 30 : index
    %157 = memref.load %arg2[%c30] : memref<72xf32, #tpu.memory_space<smem>>
    %158 = vector.broadcast %157 : f32 to vector<8x36xf32>
    %159 = arith.mulf %158, %9 : vector<8x36xf32>
    %160 = arith.addf %156, %159 : vector<8x36xf32>
    %c31 = arith.constant 31 : index
    %161 = memref.load %arg2[%c31] : memref<72xf32, #tpu.memory_space<smem>>
    %162 = vector.broadcast %161 : f32 to vector<8x36xf32>
    %163 = arith.mulf %162, %11 : vector<8x36xf32>
    %164 = arith.addf %160, %163 : vector<8x36xf32>
    %c32 = arith.constant 32 : index
    %165 = memref.load %arg2[%c32] : memref<72xf32, #tpu.memory_space<smem>>
    %166 = vector.broadcast %165 : f32 to vector<8x36xf32>
    %167 = arith.mulf %166, %13 : vector<8x36xf32>
    %168 = arith.addf %164, %167 : vector<8x36xf32>
    %c33 = arith.constant 33 : index
    %169 = memref.load %arg2[%c33] : memref<72xf32, #tpu.memory_space<smem>>
    %170 = vector.broadcast %169 : f32 to vector<8x36xf32>
    %171 = arith.mulf %170, %15 : vector<8x36xf32>
    %172 = arith.addf %168, %171 : vector<8x36xf32>
    %c34 = arith.constant 34 : index
    %173 = memref.load %arg2[%c34] : memref<72xf32, #tpu.memory_space<smem>>
    %174 = vector.broadcast %173 : f32 to vector<8x36xf32>
    %175 = arith.mulf %174, %17 : vector<8x36xf32>
    %176 = arith.addf %172, %175 : vector<8x36xf32>
    %c35 = arith.constant 35 : index
    %177 = memref.load %arg2[%c35] : memref<72xf32, #tpu.memory_space<smem>>
    %178 = vector.broadcast %177 : f32 to vector<8x36xf32>
    %179 = arith.mulf %178, %19 : vector<8x36xf32>
    %180 = arith.addf %176, %179 : vector<8x36xf32>
    %cst_40 = arith.constant 0.000000e+00 : f32
    %181 = vector.broadcast %cst_40 : f32 to vector<8x36xf32>
    %182 = arith.maximumf %180, %181 : vector<8x36xf32>
    %c0_41 = arith.constant 0 : index
    %c128 = arith.constant 128 : index
    %183 = vector.load %arg8[%c0_41, %c128] : memref<8x384xf32, #tpu.memory_space<vmem>>, vector<8x36xf32>
    tpu.vector_store %arg8[%c0_41, %c128], %182 {strides = array<i32>} : memref<8x384xf32, #tpu.memory_space<vmem>>, vector<8x36xf32>,
    %c4_42 = arith.constant 4 : index
    %184 = memref.load %arg3[%c4_42] : memref<8xf32, #tpu.memory_space<smem>>
    %c36_43 = arith.constant 36 : index
    %185 = memref.load %arg2[%c36_43] : memref<72xf32, #tpu.memory_space<smem>>
    %186 = vector.broadcast %185 : f32 to vector<8x36xf32>
    %187 = arith.mulf %186, %3 : vector<8x36xf32>
    %188 = vector.broadcast %184 : f32 to vector<8x36xf32>
    %189 = arith.addf %188, %187 : vector<8x36xf32>
    %c37 = arith.constant 37 : index
    %190 = memref.load %arg2[%c37] : memref<72xf32, #tpu.memory_space<smem>>
    %191 = vector.broadcast %190 : f32 to vector<8x36xf32>
    %192 = arith.mulf %191, %5 : vector<8x36xf32>
    %193 = arith.addf %189, %192 : vector<8x36xf32>
    %c38 = arith.constant 38 : index
    %194 = memref.load %arg2[%c38] : memref<72xf32, #tpu.memory_space<smem>>
    %195 = vector.broadcast %194 : f32 to vector<8x36xf32>
    %196 = arith.mulf %195, %7 : vector<8x36xf32>
    %197 = arith.addf %193, %196 : vector<8x36xf32>
    %c39 = arith.constant 39 : index
    %198 = memref.load %arg2[%c39] : memref<72xf32, #tpu.memory_space<smem>>
    %199 = vector.broadcast %198 : f32 to vector<8x36xf32>
    %200 = arith.mulf %199, %9 : vector<8x36xf32>
    %201 = arith.addf %197, %200 : vector<8x36xf32>
    %c40 = arith.constant 40 : index
    %202 = memref.load %arg2[%c40] : memref<72xf32, #tpu.memory_space<smem>>
    %203 = vector.broadcast %202 : f32 to vector<8x36xf32>
    %204 = arith.mulf %203, %11 : vector<8x36xf32>
    %205 = arith.addf %201, %204 : vector<8x36xf32>
    %c41 = arith.constant 41 : index
    %206 = memref.load %arg2[%c41] : memref<72xf32, #tpu.memory_space<smem>>
    %207 = vector.broadcast %206 : f32 to vector<8x36xf32>
    %208 = arith.mulf %207, %13 : vector<8x36xf32>
    %209 = arith.addf %205, %208 : vector<8x36xf32>
    %c42 = arith.constant 42 : index
    %210 = memref.load %arg2[%c42] : memref<72xf32, #tpu.memory_space<smem>>
    %211 = vector.broadcast %210 : f32 to vector<8x36xf32>
    %212 = arith.mulf %211, %15 : vector<8x36xf32>
    %213 = arith.addf %209, %212 : vector<8x36xf32>
    %c43 = arith.constant 43 : index
    %214 = memref.load %arg2[%c43] : memref<72xf32, #tpu.memory_space<smem>>
    %215 = vector.broadcast %214 : f32 to vector<8x36xf32>
    %216 = arith.mulf %215, %17 : vector<8x36xf32>
    %217 = arith.addf %213, %216 : vector<8x36xf32>
    %c44 = arith.constant 44 : index
    %218 = memref.load %arg2[%c44] : memref<72xf32, #tpu.memory_space<smem>>
    %219 = vector.broadcast %218 : f32 to vector<8x36xf32>
    %220 = arith.mulf %219, %19 : vector<8x36xf32>
    %221 = arith.addf %217, %220 : vector<8x36xf32>
    %cst_44 = arith.constant 0.000000e+00 : f32
    %222 = vector.broadcast %cst_44 : f32 to vector<8x36xf32>
    %223 = arith.maximumf %221, %222 : vector<8x36xf32>
    %c0_45 = arith.constant 0 : index
    %c164 = arith.constant 164 : index
    %224 = vector.load %arg8[%c0_45, %c164] : memref<8x384xf32, #tpu.memory_space<vmem>>, vector<8x36xf32>
    tpu.vector_store %arg8[%c0_45, %c164], %223 {strides = array<i32>} : memref<8x384xf32, #tpu.memory_space<vmem>>, vector<8x36xf32>,
    %c5_46 = arith.constant 5 : index
    %225 = memref.load %arg3[%c5_46] : memref<8xf32, #tpu.memory_space<smem>>
    %c45 = arith.constant 45 : index
    %226 = memref.load %arg2[%c45] : memref<72xf32, #tpu.memory_space<smem>>
    %227 = vector.broadcast %226 : f32 to vector<8x36xf32>
    %228 = arith.mulf %227, %3 : vector<8x36xf32>
    %229 = vector.broadcast %225 : f32 to vector<8x36xf32>
    %230 = arith.addf %229, %228 : vector<8x36xf32>
    %c46 = arith.constant 46 : index
    %231 = memref.load %arg2[%c46] : memref<72xf32, #tpu.memory_space<smem>>
    %232 = vector.broadcast %231 : f32 to vector<8x36xf32>
    %233 = arith.mulf %232, %5 : vector<8x36xf32>
    %234 = arith.addf %230, %233 : vector<8x36xf32>
    %c47 = arith.constant 47 : index
    %235 = memref.load %arg2[%c47] : memref<72xf32, #tpu.memory_space<smem>>
    %236 = vector.broadcast %235 : f32 to vector<8x36xf32>
    %237 = arith.mulf %236, %7 : vector<8x36xf32>
    %238 = arith.addf %234, %237 : vector<8x36xf32>
    %c48 = arith.constant 48 : index
    %239 = memref.load %arg2[%c48] : memref<72xf32, #tpu.memory_space<smem>>
    %240 = vector.broadcast %239 : f32 to vector<8x36xf32>
    %241 = arith.mulf %240, %9 : vector<8x36xf32>
    %242 = arith.addf %238, %241 : vector<8x36xf32>
    %c49 = arith.constant 49 : index
    %243 = memref.load %arg2[%c49] : memref<72xf32, #tpu.memory_space<smem>>
    %244 = vector.broadcast %243 : f32 to vector<8x36xf32>
    %245 = arith.mulf %244, %11 : vector<8x36xf32>
    %246 = arith.addf %242, %245 : vector<8x36xf32>
    %c50 = arith.constant 50 : index
    %247 = memref.load %arg2[%c50] : memref<72xf32, #tpu.memory_space<smem>>
    %248 = vector.broadcast %247 : f32 to vector<8x36xf32>
    %249 = arith.mulf %248, %13 : vector<8x36xf32>
    %250 = arith.addf %246, %249 : vector<8x36xf32>
    %c51 = arith.constant 51 : index
    %251 = memref.load %arg2[%c51] : memref<72xf32, #tpu.memory_space<smem>>
    %252 = vector.broadcast %251 : f32 to vector<8x36xf32>
    %253 = arith.mulf %252, %15 : vector<8x36xf32>
    %254 = arith.addf %250, %253 : vector<8x36xf32>
    %c52 = arith.constant 52 : index
    %255 = memref.load %arg2[%c52] : memref<72xf32, #tpu.memory_space<smem>>
    %256 = vector.broadcast %255 : f32 to vector<8x36xf32>
    %257 = arith.mulf %256, %17 : vector<8x36xf32>
    %258 = arith.addf %254, %257 : vector<8x36xf32>
    %c53 = arith.constant 53 : index
    %259 = memref.load %arg2[%c53] : memref<72xf32, #tpu.memory_space<smem>>
    %260 = vector.broadcast %259 : f32 to vector<8x36xf32>
    %261 = arith.mulf %260, %19 : vector<8x36xf32>
    %262 = arith.addf %258, %261 : vector<8x36xf32>
    %cst_47 = arith.constant 0.000000e+00 : f32
    %263 = vector.broadcast %cst_47 : f32 to vector<8x36xf32>
    %264 = arith.maximumf %262, %263 : vector<8x36xf32>
    %c0_48 = arith.constant 0 : index
    %c200 = arith.constant 200 : index
    %265 = vector.load %arg8[%c0_48, %c200] : memref<8x384xf32, #tpu.memory_space<vmem>>, vector<8x36xf32>
    tpu.vector_store %arg8[%c0_48, %c200], %264 {strides = array<i32>} : memref<8x384xf32, #tpu.memory_space<vmem>>, vector<8x36xf32>,
    %c6_49 = arith.constant 6 : index
    %266 = memref.load %arg3[%c6_49] : memref<8xf32, #tpu.memory_space<smem>>
    %c54 = arith.constant 54 : index
    %267 = memref.load %arg2[%c54] : memref<72xf32, #tpu.memory_space<smem>>
    %268 = vector.broadcast %267 : f32 to vector<8x36xf32>
    %269 = arith.mulf %268, %3 : vector<8x36xf32>
    %270 = vector.broadcast %266 : f32 to vector<8x36xf32>
    %271 = arith.addf %270, %269 : vector<8x36xf32>
    %c55 = arith.constant 55 : index
    %272 = memref.load %arg2[%c55] : memref<72xf32, #tpu.memory_space<smem>>
    %273 = vector.broadcast %272 : f32 to vector<8x36xf32>
    %274 = arith.mulf %273, %5 : vector<8x36xf32>
    %275 = arith.addf %271, %274 : vector<8x36xf32>
    %c56 = arith.constant 56 : index
    %276 = memref.load %arg2[%c56] : memref<72xf32, #tpu.memory_space<smem>>
    %277 = vector.broadcast %276 : f32 to vector<8x36xf32>
    %278 = arith.mulf %277, %7 : vector<8x36xf32>
    %279 = arith.addf %275, %278 : vector<8x36xf32>
    %c57 = arith.constant 57 : index
    %280 = memref.load %arg2[%c57] : memref<72xf32, #tpu.memory_space<smem>>
    %281 = vector.broadcast %280 : f32 to vector<8x36xf32>
    %282 = arith.mulf %281, %9 : vector<8x36xf32>
    %283 = arith.addf %279, %282 : vector<8x36xf32>
    %c58 = arith.constant 58 : index
    %284 = memref.load %arg2[%c58] : memref<72xf32, #tpu.memory_space<smem>>
    %285 = vector.broadcast %284 : f32 to vector<8x36xf32>
    %286 = arith.mulf %285, %11 : vector<8x36xf32>
    %287 = arith.addf %283, %286 : vector<8x36xf32>
    %c59 = arith.constant 59 : index
    %288 = memref.load %arg2[%c59] : memref<72xf32, #tpu.memory_space<smem>>
    %289 = vector.broadcast %288 : f32 to vector<8x36xf32>
    %290 = arith.mulf %289, %13 : vector<8x36xf32>
    %291 = arith.addf %287, %290 : vector<8x36xf32>
    %c60 = arith.constant 60 : index
    %292 = memref.load %arg2[%c60] : memref<72xf32, #tpu.memory_space<smem>>
    %293 = vector.broadcast %292 : f32 to vector<8x36xf32>
    %294 = arith.mulf %293, %15 : vector<8x36xf32>
    %295 = arith.addf %291, %294 : vector<8x36xf32>
    %c61 = arith.constant 61 : index
    %296 = memref.load %arg2[%c61] : memref<72xf32, #tpu.memory_space<smem>>
    %297 = vector.broadcast %296 : f32 to vector<8x36xf32>
    %298 = arith.mulf %297, %17 : vector<8x36xf32>
    %299 = arith.addf %295, %298 : vector<8x36xf32>
    %c62 = arith.constant 62 : index
    %300 = memref.load %arg2[%c62] : memref<72xf32, #tpu.memory_space<smem>>
    %301 = vector.broadcast %300 : f32 to vector<8x36xf32>
    %302 = arith.mulf %301, %19 : vector<8x36xf32>
    %303 = arith.addf %299, %302 : vector<8x36xf32>
    %cst_50 = arith.constant 0.000000e+00 : f32
    %304 = vector.broadcast %cst_50 : f32 to vector<8x36xf32>
    %305 = arith.maximumf %303, %304 : vector<8x36xf32>
    %c0_51 = arith.constant 0 : index
    %c256 = arith.constant 256 : index
    %306 = vector.load %arg8[%c0_51, %c256] : memref<8x384xf32, #tpu.memory_space<vmem>>, vector<8x36xf32>
    tpu.vector_store %arg8[%c0_51, %c256], %305 {strides = array<i32>} : memref<8x384xf32, #tpu.memory_space<vmem>>, vector<8x36xf32>,
    %c7_52 = arith.constant 7 : index
    %307 = memref.load %arg3[%c7_52] : memref<8xf32, #tpu.memory_space<smem>>
    %c63 = arith.constant 63 : index
    %308 = memref.load %arg2[%c63] : memref<72xf32, #tpu.memory_space<smem>>
    %309 = vector.broadcast %308 : f32 to vector<8x36xf32>
    %310 = arith.mulf %309, %3 : vector<8x36xf32>
    %311 = vector.broadcast %307 : f32 to vector<8x36xf32>
    %312 = arith.addf %311, %310 : vector<8x36xf32>
    %c64 = arith.constant 64 : index
    %313 = memref.load %arg2[%c64] : memref<72xf32, #tpu.memory_space<smem>>
    %314 = vector.broadcast %313 : f32 to vector<8x36xf32>
    %315 = arith.mulf %314, %5 : vector<8x36xf32>
    %316 = arith.addf %312, %315 : vector<8x36xf32>
    %c65 = arith.constant 65 : index
    %317 = memref.load %arg2[%c65] : memref<72xf32, #tpu.memory_space<smem>>
    %318 = vector.broadcast %317 : f32 to vector<8x36xf32>
    %319 = arith.mulf %318, %7 : vector<8x36xf32>
    %320 = arith.addf %316, %319 : vector<8x36xf32>
    %c66 = arith.constant 66 : index
    %321 = memref.load %arg2[%c66] : memref<72xf32, #tpu.memory_space<smem>>
    %322 = vector.broadcast %321 : f32 to vector<8x36xf32>
    %323 = arith.mulf %322, %9 : vector<8x36xf32>
    %324 = arith.addf %320, %323 : vector<8x36xf32>
    %c67 = arith.constant 67 : index
    %325 = memref.load %arg2[%c67] : memref<72xf32, #tpu.memory_space<smem>>
    %326 = vector.broadcast %325 : f32 to vector<8x36xf32>
    %327 = arith.mulf %326, %11 : vector<8x36xf32>
    %328 = arith.addf %324, %327 : vector<8x36xf32>
    %c68 = arith.constant 68 : index
    %329 = memref.load %arg2[%c68] : memref<72xf32, #tpu.memory_space<smem>>
    %330 = vector.broadcast %329 : f32 to vector<8x36xf32>
    %331 = arith.mulf %330, %13 : vector<8x36xf32>
    %332 = arith.addf %328, %331 : vector<8x36xf32>
    %c69 = arith.constant 69 : index
    %333 = memref.load %arg2[%c69] : memref<72xf32, #tpu.memory_space<smem>>
    %334 = vector.broadcast %333 : f32 to vector<8x36xf32>
    %335 = arith.mulf %334, %15 : vector<8x36xf32>
    %336 = arith.addf %332, %335 : vector<8x36xf32>
    %c70 = arith.constant 70 : index
    %337 = memref.load %arg2[%c70] : memref<72xf32, #tpu.memory_space<smem>>
    %338 = vector.broadcast %337 : f32 to vector<8x36xf32>
    %339 = arith.mulf %338, %17 : vector<8x36xf32>
    %340 = arith.addf %336, %339 : vector<8x36xf32>
    %c71 = arith.constant 71 : index
    %341 = memref.load %arg2[%c71] : memref<72xf32, #tpu.memory_space<smem>>
    %342 = vector.broadcast %341 : f32 to vector<8x36xf32>
    %343 = arith.mulf %342, %19 : vector<8x36xf32>
    %344 = arith.addf %340, %343 : vector<8x36xf32>
    %cst_53 = arith.constant 0.000000e+00 : f32
    %345 = vector.broadcast %cst_53 : f32 to vector<8x36xf32>
    %346 = arith.maximumf %344, %345 : vector<8x36xf32>
    %c0_54 = arith.constant 0 : index
    %c292 = arith.constant 292 : index
    %347 = vector.load %arg8[%c0_54, %c292] : memref<8x384xf32, #tpu.memory_space<vmem>>, vector<8x36xf32>
    tpu.vector_store %arg8[%c0_54, %c292], %346 {strides = array<i32>} : memref<8x384xf32, #tpu.memory_space<vmem>>, vector<8x36xf32>,
    %c0_55 = arith.constant 0 : index
    %c0_56 = arith.constant 0 : index
    %348 = vector.load %arg8[%c0_55, %c0_56] : memref<8x384xf32, #tpu.memory_space<vmem>>, vector<8x384xf32>
    %349 = arith.truncf %348 : vector<8x384xf32> to vector<8x384xbf16>
    %c0_57 = arith.constant 0 : index
    %c0_58 = arith.constant 0 : index
    %350 = vector.load %arg4[%c0_57, %c0_58] : memref<384x32xbf16, #tpu.memory_space<vmem>>, vector<384x32xbf16>
    %cst_59 = arith.constant dense<0.000000e+00> : vector<8x32xf32>
    %351 = tpu.matmul %349, %350, %cst_59 {dimension_numbers = #tpu.dot_dimension_numbers<[1], [0], [0], [1], [0, 0, 1, 1], [], []>} : vector<8x384xbf16>, vector<384x32xbf16>, vector<8x32xf32> -> vector<8x32xf32>
    %c0_60 = arith.constant 0 : index
    %c0_61 = arith.constant 0 : index
    %352 = vector.load %arg5[%c0_60, %c0_61] : memref<1x32xf32, #tpu.memory_space<vmem>>, vector<1x32xf32>
    %353 = vector.broadcast %352 : vector<1x32xf32> to vector<8x32xf32>
    %354 = arith.addf %351, %353 : vector<8x32xf32>
    %cst_62 = arith.constant 0.000000e+00 : f32
    %355 = vector.broadcast %cst_62 : f32 to vector<8x32xf32>
    %356 = arith.maximumf %354, %355 : vector<8x32xf32>
    %357 = arith.truncf %356 : vector<8x32xf32> to vector<8x32xbf16>
    %c0_63 = arith.constant 0 : index
    %c0_64 = arith.constant 0 : index
    %358 = vector.load %arg6[%c0_63, %c0_64] : memref<32x128xbf16, #tpu.memory_space<vmem>>, vector<32x128xbf16>
    %cst_65 = arith.constant dense<0.000000e+00> : vector<8x128xf32>
    %359 = tpu.matmul %357, %358, %cst_65 {dimension_numbers = #tpu.dot_dimension_numbers<[1], [0], [0], [1], [0, 0, 1, 1], [], []>} : vector<8x32xbf16>, vector<32x128xbf16>, vector<8x128xf32> -> vector<8x128xf32>
    %360 = arith.negf %359 : vector<8x128xf32>
    %361 = math.exp %360 : vector<8x128xf32>
    %cst_66 = arith.constant 1.000000e+00 : f32
    %362 = vector.broadcast %cst_66 : f32 to vector<8x128xf32>
    %363 = arith.addf %362, %361 : vector<8x128xf32>
    %364 = arith.divf %362, %363 : vector<8x128xf32>
    %c0_67 = arith.constant 0 : index
    %c0_68 = arith.constant 0 : index
    %365 = vector.load %arg7[%c0_67, %c0_68] : memref<8x128xf32, #tpu.memory_space<vmem>>, vector<8x128xf32>
    tpu.vector_store %arg7[%c0_67, %c0_68], %364 {strides = array<i32>} : memref<8x128xf32, #tpu.memory_space<vmem>>, vector<8x128xf32>,
    return
  }
  func.func @transform_0(%arg0: i32) -> (i32, i32, i32) {
    %c0_i32 = arith.constant 0 : i32
    %c0_i32_0 = arith.constant 0 : i32
    %c0_i32_1 = arith.constant 0 : i32
    %c0_i32_2 = arith.constant 0 : i32
    return %c0_i32, %c0_i32_0, %c0_i32_1 : i32, i32, i32
  }
  func.func @transform_1(%arg0: i32) -> i32 {
    %c0_i32 = arith.constant 0 : i32
    %c0_i32_0 = arith.constant 0 : i32
    return %c0_i32 : i32
  }
  func.func @transform_2(%arg0: i32) -> i32 {
    %c0_i32 = arith.constant 0 : i32
    %c0_i32_0 = arith.constant 0 : i32
    return %c0_i32 : i32
  }
  func.func @transform_3(%arg0: i32) -> (i32, i32) {
    %c0_i32 = arith.constant 0 : i32
    %c0_i32_0 = arith.constant 0 : i32
    %c0_i32_1 = arith.constant 0 : i32
    return %c0_i32, %c0_i32_0 : i32, i32
  }
  func.func @transform_4(%arg0: i32) -> (i32, i32) {
    %c0_i32 = arith.constant 0 : i32
    %c0_i32_0 = arith.constant 0 : i32
    %c0_i32_1 = arith.constant 0 : i32
    return %c0_i32, %c0_i32_0 : i32, i32
  }
  func.func @transform_5(%arg0: i32) -> (i32, i32) {
    %c0_i32 = arith.constant 0 : i32
    %c0_i32_0 = arith.constant 0 : i32
    return %c0_i32, %arg0 : i32, i32
  }
  func.func @transform_6(%arg0: i32) -> (i32, i32) {
    %c0_i32 = arith.constant 0 : i32
    %c0_i32_0 = arith.constant 0 : i32
    return %c0_i32, %arg0 : i32, i32
  }
}

</mosaic_0001>

<llo_original>
// kernel: bagcn_conve_forward.1
$region0: #{bagcn_conve_forward.1}
  #allocation0 [shape = 'u32[]', space=smem, size = 0x4, offset = 0x4, fixed_abs, tag = 'smem constant byte address 0x4 - core index']
  #allocation1 [shape = 'u32[72,128]{1,0:T(1,128)}', space=vmem, size = 0x9000, scoped, tag = 'internal scratch']
  #allocation2 [shape = 'f32[8,384]{1,0:T(8,128)}', space=vmem, size = 0x3000, scoped, tag = 'scratch operand']
  %s0 = inlined_call_operand.vmem [shape: f32[9,8,36], index: 0, kind: input, shape index: {}]
  %s1 = inlined_call_operand.vmem [shape: f32[72], index: 1, kind: input, shape index: {}]
  %s2 = inlined_call_operand.vmem [shape: f32[8], index: 2, kind: input, shape index: {}]
  %s3 = inlined_call_operand.vmem [shape: bf16[384,32], index: 3, kind: input, shape index: {}]
  %s4 = inlined_call_operand.vmem [shape: f32[1,32], index: 4, kind: input, shape index: {}]
  %s5 = inlined_call_operand.vmem [shape: bf16[32,128], index: 5, kind: input, shape index: {}]
  %s6 = inlined_call_operand.vmem [shape: f32[8,128], index: 6, kind: output, shape index: {}]
  %s7 = sld [smem:[#allocation0]]
  $region42: #{bagcn_conve_forward.1} parent=0
    _
  %s9 = ssub.s32 1, %s7
  %s10 = scalar_select 0, %s9, %s7
  $region1: #{bagcn_conve_forward.1} parent=0
    #allocation3 [shape = 'u8[512]{0}', space=smem, size = 0x200, scoped, tag = 'input window, operand 1, single buffered']
    #allocation4 [shape = 's32[1]{0}', space=sflag, size = 0x4, scoped, tag = 'scoped memory for bagcn_conve_forward.1']
    #allocation5 [shape = 'u8[512]{0}', space=smem, size = 0x200, scoped, tag = 'input window, operand 2, single buffered']
    #allocation6 [shape = 's32[1]{0}', space=sflag, size = 0x4, scoped, tag = 'scoped memory for bagcn_conve_forward.1']
    %11 = vsyncpa [#allocation4], 0
    %12 = vsyncpa [#allocation6], 0
    // Predicated region
    $region2: #{bagcn_conve_forward.1} parent=1 // pred_check
      _
    $region3: #{bagcn_conve_forward.1} parent=1 // pred_check_branch
      %14 = sbr.rel (0) target = $region5
    $region4: #{bagcn_conve_forward.1} parent=1 // pred_region
      _
    $region5: #{bagcn_conve_forward.1} parent=1 // pred_fallthru
      _
    // Predicated region
    $region6: #{bagcn_conve_forward.1} parent=1 // pred_check
      _
    $region7: #{bagcn_conve_forward.1} parent=1 // pred_check_branch
      %16 = sbr.rel (0) target = $region9
    $region8: #{bagcn_conve_forward.1} parent=1 // pred_region
      %18 = vsyncadd [#allocation4], 0
      %s20 = sshll.u32 %s1, 4
      %s21 = int_to_ptr.vmem [resolvable:$true] %s20
      %23 = dma.vmem_to_smem %s21, 16, [#allocation3], [#allocation4]
    $region9: #{bagcn_conve_forward.1} parent=1 // pred_fallthru
      _
    // Predicated region
    $region10: #{bagcn_conve_forward.1} parent=1 // pred_check
      _
    $region11: #{bagcn_conve_forward.1} parent=1 // pred_check_branch
      %25 = sbr.rel (0) target = $region13
    $region12: #{bagcn_conve_forward.1} parent=1 // pred_region
      %27 = vsyncadd [#allocation6], 0
      %s29 = sshll.u32 %s2, 4
      %s30 = int_to_ptr.vmem [resolvable:$true] %s29
      %32 = dma.vmem_to_smem %s30, 16, [#allocation5], [#allocation6]
    $region13: #{bagcn_conve_forward.1} parent=1 // pred_fallthru
      _
    // Predicated region
    $region14: #{bagcn_conve_forward.1} parent=1 // pred_check
      _
    $region15: #{bagcn_conve_forward.1} parent=1 // pred_check_branch
      %34 = sbr.rel (0) target = $region17
    $region16: #{bagcn_conve_forward.1} parent=1 // pred_region
      _
    $region17: #{bagcn_conve_forward.1} parent=1 // pred_fallthru
      _
    // Predicated region
    $region18: #{bagcn_conve_forward.1} parent=1 // pred_check
      _
    $region19: #{bagcn_conve_forward.1} parent=1 // pred_check_branch
      %36 = sbr.rel (0) target = $region21
    $region20: #{bagcn_conve_forward.1} parent=1 // pred_region
      _
    $region21: #{bagcn_conve_forward.1} parent=1 // pred_fallthru
      _
    // Predicated region
    $region22: #{bagcn_conve_forward.1} parent=1 // pred_check
      _
    $region23: #{bagcn_conve_forward.1} parent=1 // pred_check_branch
      %38 = sbr.rel (0) target = $region25
    $region24: #{bagcn_conve_forward.1} parent=1 // pred_region
      _
    $region25: #{bagcn_conve_forward.1} parent=1 // pred_fallthru
      _
    // Predicated region
    $region26: #{bagcn_conve_forward.1} parent=1 // pred_check
      _
    $region27: #{bagcn_conve_forward.1} parent=1 // pred_check_branch
      %40 = sbr.rel (0) target = $region29
    $region28: #{bagcn_conve_forward.1} parent=1 // pred_region
      %42 = dma.done [#allocation4], 16
    $region29: #{bagcn_conve_forward.1} parent=1 // pred_fallthru
      _
    // Predicated region
    $region30: #{bagcn_conve_forward.1} parent=1 // pred_check
      _
    $region31: #{bagcn_conve_forward.1} parent=1 // pred_check_branch
      %44 = sbr.rel (0) target = $region33
    $region32: #{bagcn_conve_forward.1} parent=1 // pred_region
      %46 = dma.done [#allocation6], 16
    $region33: #{bagcn_conve_forward.1} parent=1 // pred_fallthru
      _
    %47 = sfence
    %49 = vst [vmem:[#allocation2] sm:$0xff] 0.0
    %50 = vst [vmem:[#allocation2 + $0x8] sm:$0xff] 0.0
    %51 = vst [vmem:[#allocation2 + $0x10] sm:$0xff] 0.0
    %v52 = vld [vmem:[%s0] sm:$0xff]
    %s53 = scalar_lea.vmem %s0, 8
    %v54 = vld [vmem:[%s53] sm:$0xff]
    %s55 = scalar_lea.vmem %s0, 16
    %v56 = vld [vmem:[%s55] sm:$0xff]
    %s57 = scalar_lea.vmem %s0, 24
    %v58 = vld [vmem:[%s57] sm:$0xff]
    %s59 = scalar_lea.vmem %s0, 32
    %v60 = vld [vmem:[%s59] sm:$0xff]
    %s61 = scalar_lea.vmem %s0, 40
    %v62 = vld [vmem:[%s61] sm:$0xff]
    %s63 = scalar_lea.vmem %s0, 48
    %v64 = vld [vmem:[%s63] sm:$0xff]
    %s65 = scalar_lea.vmem %s0, 56
    %v66 = vld [vmem:[%s65] sm:$0xff]
    %s67 = scalar_lea.vmem %s0, 64
    %v68 = vld [vmem:[%s67] sm:$0xff]
    %s69 = sld [smem:[#allocation5]]
    %s70 = sld [smem:[#allocation3]]
    %v71 = vstv %s70
    %v72 = vmul.f32 %v71, %v52
    %v73 = vstv %s69
    %v74 = vadd.f32 %v73, %v72
    %s75 = sld [smem:[#allocation3 + $0x1]]
    %v76 = vstv %s75
    %v77 = vmul.f32 %v76, %v54
    %v78 = vadd.f32 %v74, %v77
    %s79 = sld [smem:[#allocation3 + $0x2]]
    %v80 = vstv %s79
    %v81 = vmul.f32 %v80, %v56
    %v82 = vadd.f32 %v78, %v81
    %s83 = sld [smem:[#allocation3 + $0x3]]
    %v84 = vstv %s83
    %v85 = vmul.f32 %v84, %v58
    %v86 = vadd.f32 %v82, %v85
    %s87 = sld [smem:[#allocation3 + $0x4]]
    %v88 = vstv %s87
    %v89 = vmul.f32 %v88, %v60
    %v90 = vadd.f32 %v86, %v89
    %s91 = sld [smem:[#allocation3 + $0x5]]
    %v92 = vstv %s91
    %v93 = vmul.f32 %v92, %v62
    %v94 = vadd.f32 %v90, %v93
    %s95 = sld [smem:[#allocation3 + $0x6]]
    %v96 = vstv %s95
    %v97 = vmul.f32 %v96, %v64
    %v98 = vadd.f32 %v94, %v97
    %s99 = sld [smem:[#allocation3 + $0x7]]
    %v100 = vstv %s99
    %v101 = vmul.f32 %v100, %v66
    %v102 = vadd.f32 %v98, %v101
    %s103 = sld [smem:[#allocation3 + $0x8]]
    %v104 = vstv %s103
    %v105 = vmul.f32 %v104, %v68
    %v106 = vadd.f32 %v102, %v105
    %v107 = vmax.f32 %v106, 0.0
    %vm108 = vcmask 293888
    %109 = vst.msk [vmem:[#allocation2] sm:$0xff] %vm108, %v107
    %s110 = sld [smem:[#allocation5 + $0x1]]
    %s111 = sld [smem:[#allocation3 + $0x9]]
    %v112 = vstv %s111
    %v113 = vmul.f32 %v112, %v52
    %v114 = vstv %s110
    %v115 = vadd.f32 %v114, %v113
    %s116 = sld [smem:[#allocation3 + $0xa]]
    %v117 = vstv %s116
    %v118 = vmul.f32 %v117, %v54
    %v119 = vadd.f32 %v115, %v118
    %s120 = sld [smem:[#allocation3 + $0xb]]
    %v121 = vstv %s120
    %v122 = vmul.f32 %v121, %v56
    %v123 = vadd.f32 %v119, %v122
    %s124 = sld [smem:[#allocation3 + $0xc]]
    %v125 = vstv %s124
    %v126 = vmul.f32 %v125, %v58
    %v127 = vadd.f32 %v123, %v126
    %s128 = sld [smem:[#allocation3 + $0xd]]
    %v129 = vstv %s128
    %v130 = vmul.f32 %v129, %v60
    %v131 = vadd.f32 %v127, %v130
    %s132 = sld [smem:[#allocation3 + $0xe]]
    %v133 = vstv %s132
    %v134 = vmul.f32 %v133, %v62
    %v135 = vadd.f32 %v131, %v134
    %s136 = sld [smem:[#allocation3 + $0xf]]
    %v137 = vstv %s136
    %v138 = vmul.f32 %v137, %v64
    %v139 = vadd.f32 %v135, %v138
    %s140 = sld [smem:[#allocation3 + $0x10]]
    %v141 = vstv %s140
    %v142 = vmul.f32 %v141, %v66
    %v143 = vadd.f32 %v139, %v142
    %s144 = sld [smem:[#allocation3 + $0x11]]
    %v145 = vstv %s144
    %v146 = vmul.f32 %v145, %v68
    %v147 = vadd.f32 %v143, %v146
    %v148 = vmax.f32 %v147, 0.0
    %150 = vrot.lane.b32.xlu0 %v148, 36
    %v151 = vpop.permute.xlu0 %150
    %vm153 = vcmask 589088
    %154 = vst.msk [vmem:[#allocation2] sm:$0xff] %vm153, %v151
    %s155 = sld [smem:[#allocation5 + $0x2]]
    %s156 = sld [smem:[#allocation3 + $0x12]]
    %v157 = vstv %s156
    %v158 = vmul.f32 %v157, %v52
    %v159 = vstv %s155
    %v160 = vadd.f32 %v159, %v158
    %s161 = sld [smem:[#allocation3 + $0x13]]
    %v162 = vstv %s161
    %v163 = vmul.f32 %v162, %v54
    %v164 = vadd.f32 %v160, %v163
    %s165 = sld [smem:[#allocation3 + $0x14]]
    %v166 = vstv %s165
    %v167 = vmul.f32 %v166, %v56
    %v168 = vadd.f32 %v164, %v167
    %s169 = sld [smem:[#allocation3 + $0x15]]
    %v170 = vstv %s169
    %v171 = vmul.f32 %v170, %v58
    %v172 = vadd.f32 %v168, %v171
    %s173 = sld [smem:[#allocation3 + $0x16]]
    %v174 = vstv %s173
    %v175 = vmul.f32 %v174, %v60
    %v176 = vadd.f32 %v172, %v175
    %s177 = sld [smem:[#allocation3 + $0x17]]
    %v178 = vstv %s177
    %v179 = vmul.f32 %v178, %v62
    %v180 = vadd.f32 %v176, %v179
    %s181 = sld [smem:[#allocation3 + $0x18]]
    %v182 = vstv %s181
    %v183 = vmul.f32 %v182, %v64
    %v184 = vadd.f32 %v180, %v183
    %s185 = sld [smem:[#allocation3 + $0x19]]
    %v186 = vstv %s185
    %v187 = vmul.f32 %v186, %v66
    %v188 = vadd.f32 %v184, %v187
    %s189 = sld [smem:[#allocation3 + $0x1a]]
    %v190 = vstv %s189
    %v191 = vmul.f32 %v190, %v68
    %v192 = vadd.f32 %v188, %v191
    %v193 = vmax.f32 %v192, 0.0
    %195 = vrot.lane.b32.xlu0 %v193, 72
    %v196 = vpop.permute.xlu0 %195
    %vm198 = vcmask 884288
    %199 = vst.msk [vmem:[#allocation2] sm:$0xff] %vm198, %v196
    %s200 = sld [smem:[#allocation5 + $0x3]]
    %s201 = sld [smem:[#allocation3 + $0x1b]]
    %v202 = vstv %s201
    %v203 = vmul.f32 %v202, %v52
    %v204 = vstv %s200
    %v205 = vadd.f32 %v204, %v203
    %s206 = sld [smem:[#allocation3 + $0x1c]]
    %v207 = vstv %s206
    %v208 = vmul.f32 %v207, %v54
    %v209 = vadd.f32 %v205, %v208
    %s210 = sld [smem:[#allocation3 + $0x1d]]
    %v211 = vstv %s210
    %v212 = vmul.f32 %v211, %v56
    %v213 = vadd.f32 %v209, %v212
    %s214 = sld [smem:[#allocation3 + $0x1e]]
    %v215 = vstv %s214
    %v216 = vmul.f32 %v215, %v58
    %v217 = vadd.f32 %v213, %v216
    %s218 = sld [smem:[#allocation3 + $0x1f]]
    %v219 = vstv %s218
    %v220 = vmul.f32 %v219, %v60
    %v221 = vadd.f32 %v217, %v220
    %s222 = sld [smem:[#allocation3 + $0x20]]
    %v223 = vstv %s222
    %v224 = vmul.f32 %v223, %v62
    %v225 = vadd.f32 %v221, %v224
    %s226 = sld [smem:[#allocation3 + $0x21]]
    %v227 = vstv %s226
    %v228 = vmul.f32 %v227, %v64
    %v229 = vadd.f32 %v225, %v228
    %s230 = sld [smem:[#allocation3 + $0x22]]
    %v231 = vstv %s230
    %v232 = vmul.f32 %v231, %v66
    %v233 = vadd.f32 %v229, %v232
    %s234 = sld [smem:[#allocation3 + $0x23]]
    %v235 = vstv %s234
    %v236 = vmul.f32 %v235, %v68
    %v237 = vadd.f32 %v233, %v236
    %v238 = vmax.f32 %v237, 0.0
    %239 = vst.msk [vmem:[#allocation2 + $0x8] sm:$0xff] %vm108, %v238
    %s240 = sld [smem:[#allocation5 + $0x4]]
    %s241 = sld [smem:[#allocation3 + $0x24]]
    %v242 = vstv %s241
    %v243 = vmul.f32 %v242, %v52
    %v244 = vstv %s240
    %v245 = vadd.f32 %v244, %v243
    %s246 = sld [smem:[#allocation3 + $0x25]]
    %v247 = vstv %s246
    %v248 = vmul.f32 %v247, %v54
    %v249 = vadd.f32 %v245, %v248
    %s250 = sld [smem:[#allocation3 + $0x26]]
    %v251 = vstv %s250
    %v252 = vmul.f32 %v251, %v56
    %v253 = vadd.f32 %v249, %v252
    %s254 = sld [smem:[#allocation3 + $0x27]]
    %v255 = vstv %s254
    %v256 = vmul.f32 %v255, %v58
    %v257 = vadd.f32 %v253, %v256
    %s258 = sld [smem:[#allocation3 + $0x28]]
    %v259 = vstv %s258
    %v260 = vmul.f32 %v259, %v60
    %v261 = vadd.f32 %v257, %v260
    %s262 = sld [smem:[#allocation3 + $0x29]]
    %v263 = vstv %s262
    %v264 = vmul.f32 %v263, %v62
    %v265 = vadd.f32 %v261, %v264
    %s266 = sld [smem:[#allocation3 + $0x2a]]
    %v267 = vstv %s266
    %v268 = vmul.f32 %v267, %v64
    %v269 = vadd.f32 %v265, %v268
    %s270 = sld [smem:[#allocation3 + $0x2b]]
    %v271 = vstv %s270
    %v272 = vmul.f32 %v271, %v66
    %v273 = vadd.f32 %v269, %v272
    %s274 = sld [smem:[#allocation3 + $0x2c]]
    %v275 = vstv %s274
    %v276 = vmul.f32 %v275, %v68
    %v277 = vadd.f32 %v273, %v276
    %v278 = vmax.f32 %v277, 0.0
    %280 = vrot.lane.b32.xlu0 %v278, 36
    %v281 = vpop.permute.xlu0 %280
    %283 = vst.msk [vmem:[#allocation2 + $0x8] sm:$0xff] %vm153, %v281
    %s284 = sld [smem:[#allocation5 + $0x5]]
    %s285 = sld [smem:[#allocation3 + $0x2d]]
    %v286 = vstv %s285
    %v287 = vmul.f32 %v286, %v52
    %v288 = vstv %s284
    %v289 = vadd.f32 %v288, %v287
    %s290 = sld [smem:[#allocation3 + $0x2e]]
    %v291 = vstv %s290
    %v292 = vmul.f32 %v291, %v54
    %v293 = vadd.f32 %v289, %v292
    %s294 = sld [smem:[#allocation3 + $0x2f]]
    %v295 = vstv %s294
    %v296 = vmul.f32 %v295, %v56
    %v297 = vadd.f32 %v293, %v296
    %s298 = sld [smem:[#allocation3 + $0x30]]
    %v299 = vstv %s298
    %v300 = vmul.f32 %v299, %v58
    %v301 = vadd.f32 %v297, %v300
    %s302 = sld [smem:[#allocation3 + $0x31]]
    %v303 = vstv %s302
    %v304 = vmul.f32 %v303, %v60
    %v305 = vadd.f32 %v301, %v304
    %s306 = sld [smem:[#allocation3 + $0x32]]
    %v307 = vstv %s306
    %v308 = vmul.f32 %v307, %v62
    %v309 = vadd.f32 %v305, %v308
    %s310 = sld [smem:[#allocation3 + $0x33]]
    %v311 = vstv %s310
    %v312 = vmul.f32 %v311, %v64
    %v313 = vadd.f32 %v309, %v312
    %s314 = sld [smem:[#allocation3 + $0x34]]
    %v315 = vstv %s314
    %v316 = vmul.f32 %v315, %v66
    %v317 = vadd.f32 %v313, %v316
    %s318 = sld [smem:[#allocation3 + $0x35]]
    %v319 = vstv %s318
    %v320 = vmul.f32 %v319, %v68
    %v321 = vadd.f32 %v317, %v320
    %v322 = vmax.f32 %v321, 0.0
    %324 = vrot.lane.b32.xlu0 %v322, 72
    %v325 = vpop.permute.xlu0 %324
    %327 = vst.msk [vmem:[#allocation2 + $0x8] sm:$0xff] %vm198, %v325
    %s328 = sld [smem:[#allocation5 + $0x6]]
    %s329 = sld [smem:[#allocation3 + $0x36]]
    %v330 = vstv %s329
    %v331 = vmul.f32 %v330, %v52
    %v332 = vstv %s328
    %v333 = vadd.f32 %v332, %v331
    %s334 = sld [smem:[#allocation3 + $0x37]]
    %v335 = vstv %s334
    %v336 = vmul.f32 %v335, %v54
    %v337 = vadd.f32 %v333, %v336
    %s338 = sld [smem:[#allocation3 + $0x38]]
    %v339 = vstv %s338
    %v340 = vmul.f32 %v339, %v56
    %v341 = vadd.f32 %v337, %v340
    %s342 = sld [smem:[#allocation3 + $0x39]]
    %v343 = vstv %s342
    %v344 = vmul.f32 %v343, %v58
    %v345 = vadd.f32 %v341, %v344
    %s346 = sld [smem:[#allocation3 + $0x3a]]
    %v347 = vstv %s346
    %v348 = vmul.f32 %v347, %v60
    %v349 = vadd.f32 %v345, %v348
    %s350 = sld [smem:[#allocation3 + $0x3b]]
    %v351 = vstv %s350
    %v352 = vmul.f32 %v351, %v62
    %v353 = vadd.f32 %v349, %v352
    %s354 = sld [smem:[#allocation3 + $0x3c]]
    %v355 = vstv %s354
    %v356 = vmul.f32 %v355, %v64
    %v357 = vadd.f32 %v353, %v356
    %s358 = sld [smem:[#allocation3 + $0x3d]]
    %v359 = vstv %s358
    %v360 = vmul.f32 %v359, %v66
    %v361 = vadd.f32 %v357, %v360
    %s362 = sld [smem:[#allocation3 + $0x3e]]
    %v363 = vstv %s362
    %v364 = vmul.f32 %v363, %v68
    %v365 = vadd.f32 %v361, %v364
    %v366 = vmax.f32 %v365, 0.0
    %367 = vst.msk [vmem:[#allocation2 + $0x10] sm:$0xff] %vm108, %v366
    %s368 = sld [smem:[#allocation5 + $0x7]]
    %s369 = sld [smem:[#allocation3 + $0x3f]]
    %v370 = vstv %s369
    %v371 = vmul.f32 %v370, %v52
    %v372 = vstv %s368
    %v373 = vadd.f32 %v372, %v371
    %s374 = sld [smem:[#allocation3 + $0x40]]
    %v375 = vstv %s374
    %v376 = vmul.f32 %v375, %v54
    %v377 = vadd.f32 %v373, %v376
    %s378 = sld [smem:[#allocation3 + $0x41]]
    %v379 = vstv %s378
    %v380 = vmul.f32 %v379, %v56
    %v381 = vadd.f32 %v377, %v380
    %s382 = sld [smem:[#allocation3 + $0x42]]
    %v383 = vstv %s382
    %v384 = vmul.f32 %v383, %v58
    %v385 = vadd.f32 %v381, %v384
    %s386 = sld [smem:[#allocation3 + $0x43]]
    %v387 = vstv %s386
    %v388 = vmul.f32 %v387, %v60
    %v389 = vadd.f32 %v385, %v388
    %s390 = sld [smem:[#allocation3 + $0x44]]
    %v391 = vstv %s390
    %v392 = vmul.f32 %v391, %v62
    %v393 = vadd.f32 %v389, %v392
    %s394 = sld [smem:[#allocation3 + $0x45]]
    %v395 = vstv %s394
    %v396 = vmul.f32 %v395, %v64
    %v397 = vadd.f32 %v393, %v396
    %s398 = sld [smem:[#allocation3 + $0x46]]
    %v399 = vstv %s398
    %v400 = vmul.f32 %v399, %v66
    %v401 = vadd.f32 %v397, %v400
    %s402 = sld [smem:[#allocation3 + $0x47]]
    %v403 = vstv %s402
    %v404 = vmul.f32 %v403, %v68
    %v405 = vadd.f32 %v401, %v404
    %v406 = vmax.f32 %v405, 0.0
    %408 = vrot.lane.b32.xlu0 %v406, 36
    %v409 = vpop.permute.xlu0 %408
    %411 = vst.msk [vmem:[#allocation2 + $0x10] sm:$0xff] %vm153, %v409
    %v412 = vld [vmem:[#allocation2] sm:$0xff]
    %v413 = vld [vmem:[#allocation2 + $0x8] sm:$0xff]
    %v414 = vld [vmem:[#allocation2 + $0x10] sm:$0xff]
    %v415 = vpack.c.bf16 %v412, %v412
    %v416 = vpack.c.bf16 %v413, %v413
    %v417 = vpack.c.bf16 %v414, %v414
    %v418 = vld [vmem:[%s3] sm:$0xf]
    %v419 = vld [vmem:[%s3 + $0x4] sm:$0xf]
    %v420 = vld [vmem:[%s3 + $0x8] sm:$0xf]
    %v421 = vld [vmem:[%s3 + $0xc] sm:$0xf]
    %v422 = vld [vmem:[%s3 + $0x10] sm:$0xf]
    %v423 = vld [vmem:[%s3 + $0x14] sm:$0xf]
    %v424 = vld [vmem:[%s3 + $0x18] sm:$0xf]
    %v425 = vld [vmem:[%s3 + $0x1c] sm:$0xf]
    %v426 = vld [vmem:[%s3 + $0x20] sm:$0xf]
    %v427 = vld [vmem:[%s3 + $0x24] sm:$0xf]
    %v428 = vld [vmem:[%s3 + $0x28] sm:$0xf]
    %v429 = vld [vmem:[%s3 + $0x2c] sm:$0xf]
    %v430 = vld [vmem:[%s3 + $0x30] sm:$0xf]
    %v431 = vld [vmem:[%s3 + $0x34] sm:$0xf]
    %v432 = vld [vmem:[%s3 + $0x38] sm:$0xf]
    %v433 = vld [vmem:[%s3 + $0x3c] sm:$0xf]
    %v434 = vld [vmem:[%s3 + $0x40] sm:$0xf]
    %v435 = vld [vmem:[%s3 + $0x44] sm:$0xf]
    %v436 = vld [vmem:[%s3 + $0x48] sm:$0xf]
    %v437 = vld [vmem:[%s3 + $0x4c] sm:$0xf]
    %v438 = vld [vmem:[%s3 + $0x50] sm:$0xf]
    %v439 = vld [vmem:[%s3 + $0x54] sm:$0xf]
    %v440 = vld [vmem:[%s3 + $0x58] sm:$0xf]
    %v441 = vld [vmem:[%s3 + $0x5c] sm:$0xf]
    %v442 = vld [vmem:[%s3 + $0x60] sm:$0xf]
    %v443 = vld [vmem:[%s3 + $0x64] sm:$0xf]
    %v444 = vld [vmem:[%s3 + $0x68] sm:$0xf]
    %v445 = vld [vmem:[%s3 + $0x6c] sm:$0xf]
    %v446 = vld [vmem:[%s3 + $0x70] sm:$0xf]
    %v447 = vld [vmem:[%s3 + $0x74] sm:$0xf]
    %v448 = vld [vmem:[%s3 + $0x78] sm:$0xf]
    %v449 = vld [vmem:[%s3 + $0x7c] sm:$0xf]
    %v450 = vld [vmem:[%s3 + $0x80] sm:$0xf]
    %v451 = vld [vmem:[%s3 + $0x84] sm:$0xf]
    %v452 = vld [vmem:[%s3 + $0x88] sm:$0xf]
    %v453 = vld [vmem:[%s3 + $0x8c] sm:$0xf]
    %v454 = vld [vmem:[%s3 + $0x90] sm:$0xf]
    %v455 = vld [vmem:[%s3 + $0x94] sm:$0xf]
    %v456 = vld [vmem:[%s3 + $0x98] sm:$0xf]
    %v457 = vld [vmem:[%s3 + $0x9c] sm:$0xf]
    %v458 = vld [vmem:[%s3 + $0xa0] sm:$0xf]
    %v459 = vld [vmem:[%s3 + $0xa4] sm:$0xf]
    %v460 = vld [vmem:[%s3 + $0xa8] sm:$0xf]
    %v461 = vld [vmem:[%s3 + $0xac] sm:$0xf]
    %v462 = vld [vmem:[%s3 + $0xb0] sm:$0xf]
    %v463 = vld [vmem:[%s3 + $0xb4] sm:$0xf]
    %v464 = vld [vmem:[%s3 + $0xb8] sm:$0xf]
    %v465 = vld [vmem:[%s3 + $0xbc] sm:$0xf]
    %v466 = vld [vmem:[%s4] sm:$0x1]
    %v468 = vperm.slane %v466, 0
    %v518 = vunpack.c.l.b16 %v418
    %v519 = vunpack.c.l.b16 %v419
    %v520 = vunpack.c.l.b16 %v420
    %v521 = vunpack.c.l.b16 %v421
    %v522 = vunpack.c.l.b16 %v422
    %v523 = vunpack.c.l.b16 %v423
    %v524 = vunpack.c.l.b16 %v424
    %v525 = vunpack.c.l.b16 %v425
    %v526 = vunpack.c.l.b16 %v426
    %v527 = vunpack.c.l.b16 %v427
    %v528 = vunpack.c.l.b16 %v428
    %v529 = vunpack.c.l.b16 %v429
    %v530 = vunpack.c.l.b16 %v430
    %v531 = vunpack.c.l.b16 %v431
    %v532 = vunpack.c.l.b16 %v432
    %v533 = vunpack.c.l.b16 %v433
    %v534 = vunpack.c.l.b16 %v434
    %v535 = vunpack.c.l.b16 %v435
    %v536 = vunpack.c.l.b16 %v436
    %v537 = vunpack.c.l.b16 %v437
    %v538 = vunpack.c.l.b16 %v438
    %v539 = vunpack.c.l.b16 %v439
    %v540 = vunpack.c.l.b16 %v440
    %v541 = vunpack.c.l.b16 %v441
    %v542 = vunpack.c.l.b16 %v442
    %v543 = vunpack.c.l.b16 %v443
    %v544 = vunpack.c.l.b16 %v444
    %v545 = vunpack.c.l.b16 %v445
    %v546 = vunpack.c.l.b16 %v446
    %v547 = vunpack.c.l.b16 %v447
    %v548 = vunpack.c.l.b16 %v448
    %v549 = vunpack.c.l.b16 %v449
    %v550 = vunpack.c.l.b16 %v450
    %v551 = vunpack.c.l.b16 %v451
    %v552 = vunpack.c.l.b16 %v452
    %v553 = vunpack.c.l.b16 %v453
    %v554 = vunpack.c.l.b16 %v454
    %v555 = vunpack.c.l.b16 %v455
    %v556 = vunpack.c.l.b16 %v456
    %v557 = vunpack.c.l.b16 %v457
    %v558 = vunpack.c.l.b16 %v458
    %v559 = vunpack.c.l.b16 %v459
    %v560 = vunpack.c.l.b16 %v460
    %v561 = vunpack.c.l.b16 %v461
    %v562 = vunpack.c.l.b16 %v462
    %v563 = vunpack.c.l.b16 %v463
    %v564 = vunpack.c.l.b16 %v464
    %v565 = vunpack.c.l.b16 %v465
    %v566 = vpack.c.b16 %v519, %v518
    %v567 = vpack.c.b16 %v521, %v520
    %v568 = vpack.c.b16 %v523, %v522
    %v569 = vpack.c.b16 %v525, %v524
    %v570 = vpack.c.b16 %v527, %v526
    %v571 = vpack.c.b16 %v529, %v528
    %v572 = vpack.c.b16 %v531, %v530
    %v573 = vpack.c.b16 %v533, %v532
    %v574 = vpack.c.b16 %v535, %v534
    %v575 = vpack.c.b16 %v537, %v536
    %v576 = vpack.c.b16 %v539, %v538
    %v577 = vpack.c.b16 %v541, %v540
    %v578 = vpack.c.b16 %v543, %v542
    %v579 = vpack.c.b16 %v545, %v544
    %v580 = vpack.c.b16 %v547, %v546
    %v581 = vpack.c.b16 %v549, %v548
    %v582 = vpack.c.b16 %v551, %v550
    %v583 = vpack.c.b16 %v553, %v552
    %v584 = vpack.c.b16 %v555, %v554
    %v585 = vpack.c.b16 %v557, %v556
    %v586 = vpack.c.b16 %v559, %v558
    %v587 = vpack.c.b16 %v561, %v560
    %v588 = vpack.c.b16 %v563, %v562
    %v589 = vpack.c.b16 %v565, %v564
    %614 = vmatpush.bf16.msra.mxu0 %v573
    %615 = vmatpush.bf16.msra.mxu0 %v572
    %616 = vmatpush.bf16.msra.mxu0 %v571
    %617 = vmatpush.bf16.msra.mxu0 %v570
    %618 = vmatpush.bf16.msra.mxu0 %v569
    %619 = vmatpush.bf16.msra.mxu0 %v568
    %620 = vmatpush.bf16.msra.mxu0 %v567
    %621 = vmatpush.bf16.msra.mxu0 %v566
    %622 = vmatmul.bf16.gmra.mxu0 %v415
    %v623 = vpop.f32.mrf.mxu0
    %v624 = vadd.f32 %v468, %v623
    %v625 = vpop.f32.mrf.mxu0
    %626 = vdwg.mxu0
    %627 = vmatpush.bf16.msra.mxu0 %v581
    %628 = vmatpush.bf16.msra.mxu0 %v580
    %629 = vmatpush.bf16.msra.mxu0 %v579
    %630 = vmatpush.bf16.msra.mxu0 %v578
    %631 = vmatpush.bf16.msra.mxu0 %v577
    %632 = vmatpush.bf16.msra.mxu0 %v576
    %633 = vmatpush.bf16.msra.mxu0 %v575
    %634 = vmatpush.bf16.msra.mxu0 %v574
    %635 = vmatmul.bf16.gmra.mxu0 %v416
    %v636 = vpop.f32.mrf.mxu0
    %v637 = vadd.f32 %v624, %v636
    %v638 = vpop.f32.mrf.mxu0
    %639 = vdwg.mxu0
    %640 = vmatpush.bf16.msra.mxu0 %v589
    %641 = vmatpush.bf16.msra.mxu0 %v588
    %642 = vmatpush.bf16.msra.mxu0 %v587
    %643 = vmatpush.bf16.msra.mxu0 %v586
    %644 = vmatpush.bf16.msra.mxu0 %v585
    %645 = vmatpush.bf16.msra.mxu0 %v584
    %646 = vmatpush.bf16.msra.mxu0 %v583
    %647 = vmatpush.bf16.msra.mxu0 %v582
    %648 = vmatmul.bf16.gmra.mxu0 %v417
    %v649 = vpop.f32.mrf.mxu0
    %v650 = vadd.f32 %v637, %v649
    %v651 = vpop.f32.mrf.mxu0
    %652 = vdwg.mxu0
    %v653 = vmax.f32 %v650, 0.0
    %v654 = vpack.c.bf16 %v653, %v653
    %v655 = vld [vmem:[%s5] sm:$0xf]
    %v656 = vld [vmem:[%s5 + $0x4] sm:$0xf]
    %v657 = vld [vmem:[%s5 + $0x8] sm:$0xf]
    %v658 = vld [vmem:[%s5 + $0xc] sm:$0xf]
    %v663 = vunpack.c.l.b16 %v655
    %v664 = vunpack.c.l.b16 %v656
    %v665 = vunpack.c.l.b16 %v657
    %v666 = vunpack.c.l.b16 %v658
    %v667 = vpack.c.b16 %v664, %v663
    %v668 = vpack.c.b16 %v666, %v665
    %vm671 = vcmask 261120
    %v673 = vsel %vm671, %v654, 0
    %675 = vmatpush.bf16.msra.mxu0 0
    %676 = vmatpush.bf16.msra.mxu0 0
    %677 = vmatpush.bf16.msra.mxu0 0
    %678 = vmatpush.bf16.msra.mxu0 0
    %679 = vmatpush.bf16.msra.mxu0 0
    %680 = vmatpush.bf16.msra.mxu0 0
    %681 = vmatpush.bf16.msra.mxu0 %v668
    %682 = vmatpush.bf16.msra.mxu0 %v667
    %683 = vmatmul.bf16.gmra.mxu0 %v673
    %v684 = vpop.f32.mrf.mxu0
    %v685 = vadd.f32 0.0, %v684
    %v686 = vpop.f32.mrf.mxu0
    %687 = vdwg.mxu0
    %v688 = vxor.u32 %v685, 2147483648
    %v689 = vmul.f32 %v688, 1.442695
    %v690 = vpow.pop %v689
    %v691 = vadd.f32 %v690, 1.0
    %v692 = vrcp.pop %v691
    %v693 = vmul.f32 %v691, %v692
    %v694 = vsub.f32 1.0, %v693
    %v695 = vmul.f32 %v692, %v694
    %v696 = vadd.f32 %v692, %v695
    %vm697 = vweird.f32 %v691
    %vm698 = vweird.f32 %v692
    %vm699 = vmor %vm697, %vm698
    %v700 = vsel %vm699, %v692, %v696
    %v701 = vand.u32 2147483647, %v691
    %vm702 = vcmp.eq.f32.partialorder %v701, 8.507059e+37
    %v703 = vand.u32 %v691, 2147483648
    %v704 = vor.u32 1.1754944e-38, %v703
    %v705 = vsel %vm702, %v704, %v700
    %v706 = vmul.f32 1.0, %v705
    %707 = vst [vmem:[%s6] sm:$0xff] %v706
    // Predicated region
    $region34: #{bagcn_conve_forward.1} parent=1 // pred_check
      _
    $region35: #{bagcn_conve_forward.1} parent=1 // pred_check_branch
      %709 = sbr.rel (0) target = $region37
    $region36: #{bagcn_conve_forward.1} parent=1 // pred_region
      _
    $region37: #{bagcn_conve_forward.1} parent=1 // pred_fallthru
      _
    // Predicated region
    $region38: #{bagcn_conve_forward.1} parent=1 // pred_check
      _
    $region39: #{bagcn_conve_forward.1} parent=1 // pred_check_branch
      %711 = sbr.rel (0) target = $region41
    $region40: #{bagcn_conve_forward.1} parent=1 // pred_region
      _
    $region41: #{bagcn_conve_forward.1} parent=1 // pred_fallthru
      _
    %712 = vsyncpa [#allocation4], 1
    %713 = vsyncpa [#allocation6], 1

</llo_original>
